<compile_context>
chip_gen: v5e
topology: v5e:2x2
jax: 0.10.0
libtpu: 0.0.40
codegen_flags: <defaults>
</compile_context>

<pallas_src>
import functools

import jax
import jax.numpy as jnp
from jax.experimental import pallas as pl
from jax.experimental.pallas import tpu as pltpu


# ---------------------------------------------------------------------------
# Kernel
# ---------------------------------------------------------------------------
def _neumf_kernel(emb_ref, w1_ref, b1_ref, w2_ref, b2_ref, out_ref, *,
                  nu_tiles):
    """One row-tile of one tower: Linear -> ReLU -> Linear.

    All scalar "* x" multiplies of the PyTorch loop are pre-folded into the
    weights/biases in the wrapper, so the kernel is pure GEMM + bias + ReLU.

    emb_ref : (tile_rows, F)   packed embedding rows (bf16)
    w1_ref  : (2, F, Hp)       stacked [user, item] first-linear weights
    b1_ref  : (2, 1, Hp)
    w2_ref  : (2, Hp, F)       stacked second-linear weights
    b2_ref  : (2, 1, F)
    out_ref : (tile_rows, F)
    """
    # Branch id: user tiles come first in the concatenated table.
    bid = (pl.program_id(0) >= nu_tiles).astype(jnp.int32)

    w1 = w1_ref[bid]            # (F, Hp)   dynamic first-axis index (resident)
    b1 = b1_ref[bid]            # (1, Hp)
    w2 = w2_ref[bid]            # (Hp, F)
    b2 = b2_ref[bid]            # (1, F)

    # Linear(E, 2E) (x folded into w1/b1), f32 accumulation on the MXU.
    h = jnp.dot(emb_ref[...], w1, preferred_element_type=jnp.float32)
    h = h + b1.astype(jnp.float32)

    # ReLU (the surrounding *x factors are folded into w1 and w2).
    t = jnp.maximum(h, 0.0).astype(w2.dtype)

    # Linear(2E, E) (x^2 folded into w2, x into b2).
    o = jnp.dot(t, w2, preferred_element_type=jnp.float32)
    out_ref[...] = (o + b2.astype(jnp.float32)).astype(out_ref.dtype)


# ---------------------------------------------------------------------------
# Packing helpers (run ONCE, outside the forward)
# ---------------------------------------------------------------------------
def _round_up(n, m):
    return ((n + m - 1) // m) * m


def _block_diag_repeat(w, p):
    """Block-diagonal stack of p copies of w: (a, b) -> (p*a, p*b)."""
    if p == 1:
        return w
    a, b = w.shape
    out = jnp.zeros((p * a, p * b), w.dtype)
    for i in range(p):
        out = out.at[i * a:(i + 1) * a, i * b:(i + 1) * b].set(w)
    return out


def _pad_and_pack(emb, p, rows_per_tile):
    """Zero-pad rows to a tile multiple and repack (N, E) -> (N/p, p*E)."""
    n, e = emb.shape
    n_pad = _round_up(n, rows_per_tile)
    if n_pad != n:
        emb = jnp.concatenate([emb, jnp.zeros((n_pad - n, e), emb.dtype)], 0)
    return emb.reshape(n_pad // p, p * e)


def pack_neumf(params, *, tile_n=4096, dtype=jnp.bfloat16):
    """One-time packing: pad/lane-pack/cast/concat the tables, build the
    block-diagonal weight layout.  Returns everything neumf_forward needs."""
    e = params["user_emb"].shape[1]
    h = 2 * e
    # Lane-packing factor: view E=64 features as 128-wide lanes when possible.
    # Deliberately capped at reaching 128 lanes (p=2 for E=64): going to p=4
    # would make the block-diagonal weights 75% zeros and push v5e/v7x into
    # the MXU-bound regime for zero bandwidth benefit.
    p = 128 // e if (e < 128 and 128 % e == 0) else 1
    f = p * e
    hp = p * h

    nu = params["user_emb"].shape[0]
    ni = params["item_emb"].shape[0]

    # Tile clamp: multiple of 16 packed rows (bf16 min tile is (16, 128)).
    max_pk = max(pl.cdiv(nu, p), pl.cdiv(ni, p))
    tile_rows = _round_up(min(int(tile_n), _round_up(max_pk, 16)), 16)
    rows_per_tile = tile_rows * p  # in original (unpacked) rows

    emb_u = _pad_and_pack(params["user_emb"], p, rows_per_tile).astype(dtype)
    emb_i = _pad_and_pack(params["item_emb"], p, rows_per_tile).astype(dtype)
    nu_pk, ni_pk = emb_u.shape[0], emb_i.shape[0]
    emb_all = jnp.concatenate([emb_u, emb_i], axis=0)

    bd = lambda w: _block_diag_repeat(w, p)
    w1_bd = jnp.stack([bd(params["w1_user"]), bd(params["w1_item"])])  # (2,F,Hp)
    w2_bd = jnp.stack([bd(params["w2_user"]), bd(params["w2_item"])])  # (2,Hp,F)
    b1_t = jnp.stack([jnp.tile(params["b1_user"], p),
                      jnp.tile(params["b1_item"], p)]).reshape(2, 1, hp)
    b2_t = jnp.stack([jnp.tile(params["b2_user"], p),
                      jnp.tile(params["b2_item"], p)]).reshape(2, 1, f)

    return {
        "emb_all": emb_all,          # (nu_pk + ni_pk, F) bf16 — lives in HBM
        "w1_bd": w1_bd, "b1_t": b1_t, "w2_bd": w2_bd, "b2_t": b2_t,  # f32
        "meta": dict(e=e, p=p, f=f, hp=hp, nu=nu, ni=ni,
                     nu_pk=nu_pk, ni_pk=ni_pk, tile_rows=tile_rows,
                     dtype=dtype),
    }


# ---------------------------------------------------------------------------
# Fused NeuMF forward (per-call work: tiny weight fold + one pallas_call)
# ---------------------------------------------------------------------------
def neumf_forward(x, packed):
    m = packed["meta"]
    e, p, f, hp = m["e"], m["p"], m["f"], m["hp"]
    nu, ni, nu_pk, ni_pk = m["nu"], m["ni"], m["nu_pk"], m["ni_pk"]
    tile_rows = m["tile_rows"]
    dtype = m["dtype"]

    xs = jnp.asarray(x).reshape(-1)[0].astype(jnp.float32)

    # Fold all three scalar multiplies into the (tiny, O(E^2)) weights:
    #   out = relu(E @ (x*W1) + x*b1) @ (x^2*W2) + x*b2      (exact)
    w1_s = (packed["w1_bd"] * xs).astype(dtype)            # (2, F, Hp)
    b1_s = (packed["b1_t"] * xs).astype(dtype)             # (2, 1, Hp)
    w2_s = (packed["w2_bd"] * (xs * xs)).astype(dtype)     # (2, Hp, F)
    b2_s = (packed["b2_t"] * xs).astype(dtype)             # (2, 1, F)

    emb_all = packed["emb_all"]
    total_pk = emb_all.shape[0]
    nu_tiles = nu_pk // tile_rows
    ni_tiles = ni_pk // tile_rows
    grid = (nu_tiles + ni_tiles,)

    # Working-set-derived VMEM limit (stays under v7x's 64 MiB at the default
    # tile; v5e/v6e have 128 MiB so this is always safe).
    itemsize = jnp.dtype(dtype).itemsize
    tile_bytes = tile_rows * f * itemsize
    weight_bytes = 2 * (f * hp + hp + hp * f + f) * itemsize
    interm_bytes = tile_rows * hp * (4 + itemsize)          # f32 hidden + bf16 t
    vmem_limit = int(1.5 * (2 * 2 * tile_bytes + 2 * weight_bytes + interm_bytes))
    vmem_limit = min(max(vmem_limit, 8 * 1024 * 1024), 96 * 1024 * 1024)

    kernel = functools.partial(_neumf_kernel, nu_tiles=nu_tiles)

    out = pl.pallas_call(
        kernel,
        out_shape=jax.ShapeDtypeStruct((total_pk, f), dtype),
        grid_spec=pltpu.PrefetchScalarGridSpec(
            num_scalar_prefetch=0,
            grid=grid,
            in_specs=[
                # packed embedding rows: tile i
                pl.BlockSpec((tile_rows, f), lambda i: (i, 0)),
                # stacked per-branch weights/biases: constant index_map =>
                # DMA'd once, fully resident; branch picked inside the kernel.
                pl.BlockSpec((2, f, hp), lambda i: (0, 0, 0)),
                pl.BlockSpec((2, 1, hp), lambda i: (0, 0, 0)),
                pl.BlockSpec((2, hp, f), lambda i: (0, 0, 0)),
                pl.BlockSpec((2, 1, f), lambda i: (0, 0, 0)),
            ],
            out_specs=pl.BlockSpec((tile_rows, f), lambda i: (i, 0)),
        ),
        compiler_params=pltpu.CompilerParams(
            dimension_semantics=("parallel",),   # shards tiles on v7x cores
            vmem_limit_bytes=vmem_limit,
        ),
    )(emb_all, w1_s, b1_s, w2_s, b2_s)

    # Unpack back to (rows, E) and drop padding rows.  Large-table consumers
    # should take the packed (total_pk, F) layout directly to avoid this pass.
    user_out = out[:nu_pk].reshape(nu_pk * p, e)[:nu]
    item_out = out[nu_pk:].reshape(ni_pk * p, e)[:ni]
    return user_out, item_out


# ---------------------------------------------------------------------------
# Pure-JAX reference with the same bf16 storage quantization
# ---------------------------------------------------------------------------
def reference_forward(x, params, dtype=jnp.bfloat16):
    f32 = jnp.float32
    xs = jnp.asarray(x).reshape(-1)[0].astype(f32)

    def tower(emb, w1, b1, w2, b2):
        emb_q = emb.astype(dtype).astype(f32)
        w1f = (w1 * xs).astype(dtype).astype(f32)
        b1f = (b1 * xs).astype(dtype).astype(f32)
        w2f = (w2 * xs * xs).astype(dtype).astype(f32)
        b2f = (b2 * xs).astype(dtype).astype(f32)
        h = emb_q @ w1f + b1f                              # (Lin) * x (folded)
        t = jnp.maximum(h, 0.0).astype(dtype).astype(f32)  # ReLU (* x folded)
        return (t @ w2f + b2f).astype(dtype)               # (Lin) * x (folded)

    u = tower(params["user_emb"], params["w1_user"], params["b1_user"],
              params["w2_user"], params["b2_user"])
    i = tower(params["item_emb"], params["w1_item"], params["b1_item"],
              params["w2_item"], params["b2_item"])
    return u, i


# ---------------------------------------------------------------------------
# Parameter init (mirrors the PyTorch module; Linear weights pre-transposed)
# ---------------------------------------------------------------------------
def xavier_uniform(key, shape):
    fan_out, fan_in = shape[0], shape[1]
    bound = (6.0 / (fan_in + fan_out)) ** 0.5
    return jax.random.uniform(key, shape, jnp.float32, -bound, bound)


def init_params(key, n_users, n_items, embed_size):
    ks = jax.random.split(key, 10)
    e, h = embed_size, embed_size * 2
    return {
        # nn.Embedding(n+1, E) weights, xavier_uniform init
        "user_emb": xavier_uniform(ks[0], (n_users + 1, e)),
        "item_emb": xavier_uniform(ks[1], (n_items + 1, e)),
        # nn.Linear(E, 2E) / nn.Linear(2E, E), stored pre-transposed (in, out)
        "w1_user": xavier_uniform(ks[2], (e, h)),
        "b1_user": jax.random.uniform(ks[3], (h,), jnp.float32, -0.1, 0.1),
        "w2_user": xavier_uniform(ks[4], (h, e)),
        "b2_user": jax.random.uniform(ks[5], (e,), jnp.float32, -0.1, 0.1),
        "w1_item": xavier_uniform(ks[6], (e, h)),
        "b1_item": jax.random.uniform(ks[7], (h,), jnp.float32, -0.1, 0.1),
        "w2_item": xavier_uniform(ks[8], (h, e)),
        "b2_item": jax.random.uniform(ks[9], (e,), jnp.float32, -0.1, 0.1),
    }


if __name__ == "__main__":
    # Small synthetic configuration: embed_size=64, 128 user rows, 256 item rows.
    EMBED_SIZE = 64
    N_USERS = 127   # table has n_users + 1 = 128 rows
    N_ITEMS = 255   # table has n_items + 1 = 256 rows

    key = jax.random.PRNGKey(0)
    pkey, xkey = jax.random.split(key)
    params = init_params(pkey, N_USERS, N_ITEMS, EMBED_SIZE)

    # x must broadcast against both (N, 2E) and (N, E) in the PyTorch loop,
    # so it is a scalar multiplier.
    x = jax.random.uniform(xkey, (1, 1), jnp.float32, 0.5, 1.5)

    # One-time packing (tables padded / lane-packed / bf16 / concatenated).
    packed = pack_neumf(params, tile_n=4096)

    fwd = jax.jit(lambda xx: neumf_forward(xx, packed))
    user_top, item_top = fwd(x)
    jax.block_until_ready((user_top, item_top))

    # Correctness check against a pure-JAX reference with matching bf16 storage.
    ref_user, ref_item = reference_forward(x, params)
    assert user_top.shape == (N_USERS + 1, EMBED_SIZE)
    assert item_top.shape == (N_ITEMS + 1, EMBED_SIZE)
    assert jnp.allclose(user_top.astype(jnp.float32), ref_user.astype(jnp.float32),
                        atol=2e-2, rtol=2e-2)
    assert jnp.allclose(item_top.astype(jnp.float32), ref_item.astype(jnp.float32),
                        atol=2e-2, rtol=2e-2)

    print("KERNEL_OK")
</pallas_src>

<mosaic_0001>
module attributes {stable_mosaic.version = 11 : i64} {
  func.func @_neumf_kernel(%arg0: i32, %arg1: memref<128x128xbf16, #tpu.memory_space<vmem>>, %arg2: memref<2x128x256xbf16, #tpu.memory_space<vmem>>, %arg3: memref<2x1x256xbf16, #tpu.memory_space<vmem>>, %arg4: memref<2x256x128xbf16, #tpu.memory_space<vmem>>, %arg5: memref<2x1x128xbf16, #tpu.memory_space<vmem>>, %arg6: memref<128x128xbf16, #tpu.memory_space<vmem>>) attributes {dimension_semantics = [#tpu.dimension_semantics<parallel>], iteration_bounds = array<i64: 2>, scalar_prefetch = 0 : i64, scratch_operands = 0 : i64, tpu.core_type = #tpu.core_type<tc>, window_params = [{transform_indices = @transform_0, window_bounds = array<i64: 128, 128>}, {pipeline_mode = #tpu.pipeline_mode<synchronous>, transform_indices = @transform_1, window_bounds = array<i64: 2, 128, 256>}, {pipeline_mode = #tpu.pipeline_mode<synchronous>, transform_indices = @transform_2, window_bounds = array<i64: 2, 1, 256>}, {pipeline_mode = #tpu.pipeline_mode<synchronous>, transform_indices = @transform_3, window_bounds = array<i64: 2, 256, 128>}, {pipeline_mode = #tpu.pipeline_mode<synchronous>, transform_indices = @transform_4, window_bounds = array<i64: 2, 1, 128>}, {transform_indices = @transform_5, window_bounds = array<i64: 128, 128>}]} {
    %c1_i32 = arith.constant 1 : i32
    %0 = arith.cmpi sge, %arg0, %c1_i32 : i32
    %1 = arith.extui %0 : i1 to i32
    %2 = arith.index_cast %1 : i32 to index
    %c0 = arith.constant 0 : index
    %c0_0 = arith.constant 0 : index
    %3 = vector.load %arg2[%2, %c0, %c0_0] : memref<2x128x256xbf16, #tpu.memory_space<vmem>>, vector<1x128x256xbf16>
    %4 = vector.shape_cast %3 : vector<1x128x256xbf16> to vector<128x256xbf16>
    %5 = arith.index_cast %1 : i32 to index
    %c0_1 = arith.constant 0 : index
    %c0_2 = arith.constant 0 : index
    %6 = vector.load %arg3[%5, %c0_1, %c0_2] : memref<2x1x256xbf16, #tpu.memory_space<vmem>>, vector<1x1x256xbf16>
    %7 = vector.shape_cast %6 : vector<1x1x256xbf16> to vector<1x256xbf16>
    %8 = arith.index_cast %1 : i32 to index
    %c0_3 = arith.constant 0 : index
    %c0_4 = arith.constant 0 : index
    %9 = vector.load %arg4[%8, %c0_3, %c0_4] : memref<2x256x128xbf16, #tpu.memory_space<vmem>>, vector<1x256x128xbf16>
    %10 = vector.shape_cast %9 : vector<1x256x128xbf16> to vector<256x128xbf16>
    %11 = arith.index_cast %1 : i32 to index
    %c0_5 = arith.constant 0 : index
    %c0_6 = arith.constant 0 : index
    %12 = vector.load %arg5[%11, %c0_5, %c0_6] : memref<2x1x128xbf16, #tpu.memory_space<vmem>>, vector<1x1x128xbf16>
    %13 = vector.shape_cast %12 : vector<1x1x128xbf16> to vector<1x128xbf16>
    %c0_7 = arith.constant 0 : index
    %c0_8 = arith.constant 0 : index
    %14 = vector.load %arg1[%c0_7, %c0_8] : memref<128x128xbf16, #tpu.memory_space<vmem>>, vector<128x128xbf16>
    %cst = arith.constant dense<0.000000e+00> : vector<128x256xf32>
    %15 = tpu.matmul %14, %4, %cst {dimension_numbers = #tpu.dot_dimension_numbers<[1], [0], [0], [1], [0, 0, 1, 1], [], []>} : vector<128x128xbf16>, vector<128x256xbf16>, vector<128x256xf32> -> vector<128x256xf32>
    %16 = arith.extf %7 : vector<1x256xbf16> to vector<1x256xf32>
    %17 = vector.broadcast %16 : vector<1x256xf32> to vector<128x256xf32>
    %18 = arith.addf %15, %17 : vector<128x256xf32>
    %cst_9 = arith.constant 0.000000e+00 : f32
    %19 = vector.broadcast %cst_9 : f32 to vector<128x256xf32>
    %20 = arith.maximumf %18, %19 : vector<128x256xf32>
    %21 = arith.truncf %20 : vector<128x256xf32> to vector<128x256xbf16>
    %cst_10 = arith.constant dense<0.000000e+00> : vector<128x128xf32>
    %22 = tpu.matmul %21, %10, %cst_10 {dimension_numbers = #tpu.dot_dimension_numbers<[1], [0], [0], [1], [0, 0, 1, 1], [], []>} : vector<128x256xbf16>, vector<256x128xbf16>, vector<128x128xf32> -> vector<128x128xf32>
    %23 = arith.extf %13 : vector<1x128xbf16> to vector<1x128xf32>
    %24 = vector.broadcast %23 : vector<1x128xf32> to vector<128x128xf32>
    %25 = arith.addf %22, %24 : vector<128x128xf32>
    %26 = arith.truncf %25 : vector<128x128xf32> to vector<128x128xbf16>
    %c0_11 = arith.constant 0 : index
    %c0_12 = arith.constant 0 : index
    %27 = vector.load %arg6[%c0_11, %c0_12] : memref<128x128xbf16, #tpu.memory_space<vmem>>, vector<128x128xbf16>
    tpu.vector_store %arg6[%c0_11, %c0_12], %26 {strides = array<i32>} : memref<128x128xbf16, #tpu.memory_space<vmem>>, vector<128x128xbf16>,
    return
  }
  func.func @transform_0(%arg0: i32) -> (i32, i32) {
    %c0_i32 = arith.constant 0 : i32
    %c0_i32_0 = arith.constant 0 : i32
    return %arg0, %c0_i32 : i32, i32
  }
  func.func @transform_1(%arg0: i32) -> (i32, i32, i32) {
    %c0_i32 = arith.constant 0 : i32
    %c0_i32_0 = arith.constant 0 : i32
    %c0_i32_1 = arith.constant 0 : i32
    %c0_i32_2 = arith.constant 0 : i32
    return %c0_i32, %c0_i32_0, %c0_i32_1 : i32, i32, i32
  }
  func.func @transform_2(%arg0: i32) -> (i32, i32, i32) {
    %c0_i32 = arith.constant 0 : i32
    %c0_i32_0 = arith.constant 0 : i32
    %c0_i32_1 = arith.constant 0 : i32
    %c0_i32_2 = arith.constant 0 : i32
    return %c0_i32, %c0_i32_0, %c0_i32_1 : i32, i32, i32
  }
  func.func @transform_3(%arg0: i32) -> (i32, i32, i32) {
    %c0_i32 = arith.constant 0 : i32
    %c0_i32_0 = arith.constant 0 : i32
    %c0_i32_1 = arith.constant 0 : i32
    %c0_i32_2 = arith.constant 0 : i32
    return %c0_i32, %c0_i32_0, %c0_i32_1 : i32, i32, i32
  }
  func.func @transform_4(%arg0: i32) -> (i32, i32, i32) {
    %c0_i32 = arith.constant 0 : i32
    %c0_i32_0 = arith.constant 0 : i32
    %c0_i32_1 = arith.constant 0 : i32
    %c0_i32_2 = arith.constant 0 : i32
    return %c0_i32, %c0_i32_0, %c0_i32_1 : i32, i32, i32
  }
  func.func @transform_5(%arg0: i32) -> (i32, i32) {
    %c0_i32 = arith.constant 0 : i32
    %c0_i32_0 = arith.constant 0 : i32
    return %arg0, %c0_i32 : i32, i32
  }
}

</mosaic_0001>

<llo_original>
// kernel: _lambda_.1
$region0: #{_lambda_.1}
  #allocation0 [shape = 'u32[]', space=smem, size = 0x4, offset = 0x4, fixed_abs, tag = 'smem constant byte address 0x4 - core index']
  #allocation1 [shape = 'u32[72,128]{1,0:T(1,128)}', space=vmem, size = 0x9000, scoped, tag = 'internal scratch']
  %s0 = inlined_call_operand.vmem [shape: bf16[256,128], index: 0, kind: input, shape index: {}]
  %s1 = inlined_call_operand.vmem [shape: bf16[2,128,256], index: 1, kind: input, shape index: {}]
  %s2 = inlined_call_operand.vmem [shape: bf16[2,1,256], index: 2, kind: input, shape index: {}]
  %s3 = inlined_call_operand.vmem [shape: bf16[2,256,128], index: 3, kind: input, shape index: {}]
  %s4 = inlined_call_operand.vmem [shape: bf16[2,1,128], index: 4, kind: input, shape index: {}]
  %s5 = inlined_call_operand.vmem [shape: bf16[256,128], index: 5, kind: output, shape index: {}]
  %s6 = sld [smem:[#allocation0]]
  $region53: #{_lambda_.1} parent=0
    _
  %s8 = ssub.s32 1, %s6
  %s9 = scalar_select 0, %s8, %s6
  loop: start=0, step=1, limit=4
  $region2: #{_lambda_.1} parent=0 // loop_pre_header
    _
  $region3: #{_lambda_.1} parent=0 // loop_header
    %s11 = sphi 0, %s15
    %p12 = scmp.ge.s32.totalorder %s11, 4
    %s21 = sphi 0, %s23
    %s24 = sphi 0, %s21
    %s25 = sphi 0, %s24
    %s41 = sphi 0, %s25
    %s45 = sphi 0, %s45
    %s47 = sphi 0, %s45
    %s48 = sphi 0, %s47
    %s62 = sphi 0, %s48
    %s66 = sphi 0, %s66
    %s68 = sphi 0, %s66
    %s69 = sphi 0, %s68
    %s83 = sphi 0, %s69
    %s87 = sphi 0, %s87
    %s89 = sphi 0, %s87
    %s90 = sphi 0, %s89
    %s104 = sphi 0, %s90
    %s108 = sphi 0, %s108
    %s110 = sphi 0, %s108
    %s111 = sphi 0, %s110
    %s125 = sphi 0, %s111
    %s131 = sphi 0, %s133
    %s134 = sphi 0, %s131
    %s135 = sphi 0, %s134
    %s151 = sphi 0, %s135
  $region4: #{_lambda_.1} parent=0 // loop_header_branch
    %14 = sbr.rel (%p12) target = $region8
  $region5: #{_lambda_.1} parent=0 // loop_body
    %s16 = ssub.s32 %s11, 1
    %s17 = ssub.s32 %s11, 2
    %s18 = sadd.s32 %s11, 1
    %s19 = ssub.s32 %s11, %s18
    %p20 = scmp.eq.s32.totalorder %s19, 0
    %s22 = sadd.s32 %s21, 1
    %s23 = scalar_select %p20, %s21, %s22
    %p26 = pneg %p20
    %p27 = scmp.eq.s32.totalorder %s11, 1
    %p28 = por %p26, %p27
    %p29 = scmp.ne.s32.totalorder %s21, %s24
    %p30 = scmp.eq.s32.totalorder %s11, 0
    %p31 = por %p29, %p30
    %p32 = scmp.ne.s32.totalorder %s21, %s24
    %p33 = scmp.eq.s32.totalorder %s16, 1
    %p34 = por %p32, %p33
    %p35 = scmp.ne.s32.totalorder %s24, %s25
    %p36 = scmp.eq.s32.totalorder %s16, 0
    %p37 = por %p35, %p36
    %p38 = scmp.ne.s32.totalorder %s24, %s25
    %p39 = scmp.eq.s32.totalorder %s17, 1
    %p40 = por %p38, %p39
    %p42 = scmp.ne.s32.totalorder %s25, %s41
    %p43 = scmp.eq.s32.totalorder %s17, 0
    %p44 = por %p42, %p43
    %s46 = sadd.s32 %s45, 1
    %p49 = scmp.eq.s32.totalorder %s11, 1
    %p50 = scmp.ne.s32.totalorder %s45, %s47
    %p51 = scmp.eq.s32.totalorder %s11, 0
    %p52 = por %p50, %p51
    %p53 = scmp.ne.s32.totalorder %s45, %s47
    %p54 = scmp.eq.s32.totalorder %s16, 1
    %p55 = por %p53, %p54
    %p56 = scmp.ne.s32.totalorder %s47, %s48
    %p57 = scmp.eq.s32.totalorder %s16, 0
    %p58 = por %p56, %p57
    %p59 = scmp.ne.s32.totalorder %s47, %s48
    %p60 = scmp.eq.s32.totalorder %s17, 1
    %p61 = por %p59, %p60
    %p63 = scmp.ne.s32.totalorder %s48, %s62
    %p64 = scmp.eq.s32.totalorder %s17, 0
    %p65 = por %p63, %p64
    %s67 = sadd.s32 %s66, 1
    %p70 = scmp.eq.s32.totalorder %s11, 1
    %p71 = scmp.ne.s32.totalorder %s66, %s68
    %p72 = scmp.eq.s32.totalorder %s11, 0
    %p73 = por %p71, %p72
    %p74 = scmp.ne.s32.totalorder %s66, %s68
    %p75 = scmp.eq.s32.totalorder %s16, 1
    %p76 = por %p74, %p75
    %p77 = scmp.ne.s32.totalorder %s68, %s69
    %p78 = scmp.eq.s32.totalorder %s16, 0
    %p79 = por %p77, %p78
    %p80 = scmp.ne.s32.totalorder %s68, %s69
    %p81 = scmp.eq.s32.totalorder %s17, 1
    %p82 = por %p80, %p81
    %p84 = scmp.ne.s32.totalorder %s69, %s83
    %p85 = scmp.eq.s32.totalorder %s17, 0
    %p86 = por %p84, %p85
    %s88 = sadd.s32 %s87, 1
    %p91 = scmp.eq.s32.totalorder %s11, 1
    %p92 = scmp.ne.s32.totalorder %s87, %s89
    %p93 = scmp.eq.s32.totalorder %s11, 0
    %p94 = por %p92, %p93
    %p95 = scmp.ne.s32.totalorder %s87, %s89
    %p96 = scmp.eq.s32.totalorder %s16, 1
    %p97 = por %p95, %p96
    %p98 = scmp.ne.s32.totalorder %s89, %s90
    %p99 = scmp.eq.s32.totalorder %s16, 0
    %p100 = por %p98, %p99
    %p101 = scmp.ne.s32.totalorder %s89, %s90
    %p102 = scmp.eq.s32.totalorder %s17, 1
    %p103 = por %p101, %p102
    %p105 = scmp.ne.s32.totalorder %s90, %s104
    %p106 = scmp.eq.s32.totalorder %s17, 0
    %p107 = por %p105, %p106
    %s109 = sadd.s32 %s108, 1
    %p112 = scmp.eq.s32.totalorder %s11, 1
    %p113 = scmp.ne.s32.totalorder %s108, %s110
    %p114 = scmp.eq.s32.totalorder %s11, 0
    %p115 = por %p113, %p114
    %p116 = scmp.ne.s32.totalorder %s108, %s110
    %p117 = scmp.eq.s32.totalorder %s16, 1
    %p118 = por %p116, %p117
    %p119 = scmp.ne.s32.totalorder %s110, %s111
    %p120 = scmp.eq.s32.totalorder %s16, 0
    %p121 = por %p119, %p120
    %p122 = scmp.ne.s32.totalorder %s110, %s111
    %p123 = scmp.eq.s32.totalorder %s17, 1
    %p124 = por %p122, %p123
    %p126 = scmp.ne.s32.totalorder %s111, %s125
    %p127 = scmp.eq.s32.totalorder %s17, 0
    %p128 = por %p126, %p127
    %s129 = ssub.s32 %s11, %s18
    %p130 = scmp.eq.s32.totalorder %s129, 0
    %s132 = sadd.s32 %s131, 1
    %s133 = scalar_select %p130, %s131, %s132
    %p136 = pneg %p130
    %p137 = scmp.eq.s32.totalorder %s11, 1
    %p138 = por %p136, %p137
    %p139 = scmp.ne.s32.totalorder %s131, %s134
    %p140 = scmp.eq.s32.totalorder %s11, 0
    %p141 = por %p139, %p140
    %p142 = scmp.ne.s32.totalorder %s131, %s134
    %p143 = scmp.eq.s32.totalorder %s16, 1
    %p144 = por %p142, %p143
    %p145 = scmp.ne.s32.totalorder %s134, %s135
    %p146 = scmp.eq.s32.totalorder %s16, 0
    %p147 = por %p145, %p146
    %p148 = scmp.ne.s32.totalorder %s134, %s135
    %p149 = scmp.eq.s32.totalorder %s17, 1
    %p150 = por %p148, %p149
    %p152 = scmp.ne.s32.totalorder %s135, %s151
    %p153 = scmp.eq.s32.totalorder %s17, 0
    %p154 = por %p152, %p153
    %p155 = scmp.le.s32.totalorder 1, %s11
    %p156 = scmp.lt.s32.totalorder %s11, 3
    %p157 = pnand %p155, %p156
    %p158 = pneg %p157
    // Predicated region
    $region9: #{_lambda_.1} parent=5 // pred_check
      _
    $region10: #{_lambda_.1} parent=5 // pred_check_branch
      %160 = sbr.rel (%p157) target = $region12
    $region11: #{_lambda_.1} parent=5 // pred_region
      %s161 = ssub.s32 %s11, 1
      // Predicated region
      $region13: #{_lambda_.1} parent=11 // pred_check
        %p162 = pneg %p58
      $region14: #{_lambda_.1} parent=11 // pred_check_branch
        %164 = sbr.rel (%p162) target = $region16
      $region15: #{_lambda_.1} parent=11 // pred_region
        _
      $region16: #{_lambda_.1} parent=11 // pred_fallthru
        _
      // Predicated region
      $region17: #{_lambda_.1} parent=11 // pred_check
        %p165 = pneg %p79
      $region18: #{_lambda_.1} parent=11 // pred_check_branch
        %167 = sbr.rel (%p165) target = $region20
      $region19: #{_lambda_.1} parent=11 // pred_region
        _
      $region20: #{_lambda_.1} parent=11 // pred_fallthru
        _
      // Predicated region
      $region21: #{_lambda_.1} parent=11 // pred_check
        %p168 = pneg %p100
      $region22: #{_lambda_.1} parent=11 // pred_check_branch
        %170 = sbr.rel (%p168) target = $region24
      $region23: #{_lambda_.1} parent=11 // pred_region
        _
      $region24: #{_lambda_.1} parent=11 // pred_fallthru
        _
      // Predicated region
      $region25: #{_lambda_.1} parent=11 // pred_check
        %p171 = pneg %p121
      $region26: #{_lambda_.1} parent=11 // pred_check_branch
        %173 = sbr.rel (%p171) target = $region28
      $region27: #{_lambda_.1} parent=11 // pred_region
        _
      $region28: #{_lambda_.1} parent=11 // pred_fallthru
        _
    $region12: #{_lambda_.1} parent=5 // pred_fallthru
      _
    %p174 = scmp.lt.s32.totalorder %s11, 2
    // Predicated region
    $region29: #{_lambda_.1} parent=5 // pred_check
      %p175 = pneg %p174
    $region30: #{_lambda_.1} parent=5 // pred_check_branch
      %177 = sbr.rel (%p175) target = $region32
    $region31: #{_lambda_.1} parent=5 // pred_region
      // Predicated region
      $region33: #{_lambda_.1} parent=31 // pred_check
        %p178 = pneg %p31
      $region34: #{_lambda_.1} parent=31 // pred_check_branch
        %180 = sbr.rel (%p178) target = $region36
      $region35: #{_lambda_.1} parent=31 // pred_region
        %s181 = smul.u32 16, %s11
        %p182 = scmp.lt.s32.totalorder %s181, 31
        %s183 = scalar_select %p182, %s181, 31
        %s184 = smul.addr %s183, 4
        %s185 = scalar_lea.vmem %s0, %s184
        %s186 = smul.u32 16, %s11
      $region36: #{_lambda_.1} parent=31 // pred_fallthru
        _
    $region32: #{_lambda_.1} parent=5 // pred_fallthru
      _
    %p187 = scmp.le.s32.totalorder 1, %s11
    %p188 = scmp.lt.s32.totalorder %s11, 3
    %p189 = pnand %p187, %p188
    %p190 = pneg %p189
    // Predicated region
    $region37: #{_lambda_.1} parent=5 // pred_check
      _
    $region38: #{_lambda_.1} parent=5 // pred_check_branch
      %192 = sbr.rel (%p189) target = $region40
    $region39: #{_lambda_.1} parent=5 // pred_region
      %s193 = ssub.s32 %s11, 1
      %s194 = smul.u32 16, %s16
      %p195 = scmp.lt.s32.totalorder %s194, 31
      %s196 = scalar_select %p195, %s194, 31
      %s197 = smul.addr %s196, 4
      %s198 = scalar_lea.vmem %s0, %s197
      %p199 = pneg %p37
      %p200 = pneg %p34
      %p201 = pneg %p58
      %p202 = pneg %p55
      %p203 = pneg %p79
      %p204 = pneg %p76
      %p205 = pneg %p100
      %p206 = pneg %p97
      %p207 = pneg %p121
      %p208 = pneg %p118
      %p209 = pneg %p147
      %p210 = pneg %p144
      %s211 = smul.u32 16, %s16
      %p212 = scmp.lt.s32.totalorder %s211, 31
      %s213 = scalar_select %p212, %s211, 31
      %s214 = smul.addr %s213, 4
      %s215 = scalar_lea.vmem %s5, %s214
      %s216 = smul.u32 16, %s16
      %p217 = scmp.lt.s32.totalorder %s216, 31
      %s218 = scalar_select %p217, %s216, 31
      %s219 = smul.addr %s218, 4
      %s220 = scalar_lea.vmem %s0, %s219
      %s221 = smul.u32 16, %s16
      %s222 = smul.u32 16, %s16
      %p223 = scmp.lt.s32.totalorder %s222, 31
      %s224 = scalar_select %p223, %s222, 31
      %s225 = smul.addr %s224, 4
      %s226 = scalar_lea.vmem %s5, %s225
      %s227 = smul.u32 16, %s16
      %p228 = scmp.ge.s32.totalorder %s16, 1
      %s229 = scalar_select %p228, 1, 0
      %s230 = smul.u32 %s229, 32
      %s231 = smul.addr %s230, 4
      %s232 = scalar_lea.vmem %s1, %s231
      %v233 = vld [vmem:[%s232] sm:$0xff]
      %v234 = vld [vmem:[%s232 + $0x8] sm:$0xff]
      %v235 = vld [vmem:[%s232 + $0x10] sm:$0xff]
      %v236 = vld [vmem:[%s232 + $0x18] sm:$0xff]
      %v237 = vld [vmem:[%s232 + $0x20] sm:$0xff]
      %v238 = vld [vmem:[%s232 + $0x28] sm:$0xff]
      %v239 = vld [vmem:[%s232 + $0x30] sm:$0xff]
      %v240 = vld [vmem:[%s232 + $0x38] sm:$0xff]
      %v241 = vld [vmem:[%s232 + $0x40] sm:$0xff]
      %v242 = vld [vmem:[%s232 + $0x48] sm:$0xff]
      %v243 = vld [vmem:[%s232 + $0x50] sm:$0xff]
      %v244 = vld [vmem:[%s232 + $0x58] sm:$0xff]
      %v245 = vld [vmem:[%s232 + $0x60] sm:$0xff]
      %v246 = vld [vmem:[%s232 + $0x68] sm:$0xff]
      %v247 = vld [vmem:[%s232 + $0x70] sm:$0xff]
      %v248 = vld [vmem:[%s232 + $0x78] sm:$0xff]
      %s249 = smul.u32 %s229, 2
      %s250 = scalar_lea.vmem %s2, %s249
      %v251 = vld [vmem:[%s250] sm:$0x3]
      %s252 = smul.addr %s230, 4
      %s253 = scalar_lea.vmem %s3, %s252
      %v254 = vld [vmem:[%s253] sm:$0xf]
      %v255 = vld [vmem:[%s253 + $0x4] sm:$0xf]
      %v256 = vld [vmem:[%s253 + $0x8] sm:$0xf]
      %v257 = vld [vmem:[%s253 + $0xc] sm:$0xf]
      %v258 = vld [vmem:[%s253 + $0x10] sm:$0xf]
      %v259 = vld [vmem:[%s253 + $0x14] sm:$0xf]
      %v260 = vld [vmem:[%s253 + $0x18] sm:$0xf]
      %v261 = vld [vmem:[%s253 + $0x1c] sm:$0xf]
      %v262 = vld [vmem:[%s253 + $0x20] sm:$0xf]
      %v263 = vld [vmem:[%s253 + $0x24] sm:$0xf]
      %v264 = vld [vmem:[%s253 + $0x28] sm:$0xf]
      %v265 = vld [vmem:[%s253 + $0x2c] sm:$0xf]
      %v266 = vld [vmem:[%s253 + $0x30] sm:$0xf]
      %v267 = vld [vmem:[%s253 + $0x34] sm:$0xf]
      %v268 = vld [vmem:[%s253 + $0x38] sm:$0xf]
      %v269 = vld [vmem:[%s253 + $0x3c] sm:$0xf]
      %v270 = vld [vmem:[%s253 + $0x40] sm:$0xf]
      %v271 = vld [vmem:[%s253 + $0x44] sm:$0xf]
      %v272 = vld [vmem:[%s253 + $0x48] sm:$0xf]
      %v273 = vld [vmem:[%s253 + $0x4c] sm:$0xf]
      %v274 = vld [vmem:[%s253 + $0x50] sm:$0xf]
      %v275 = vld [vmem:[%s253 + $0x54] sm:$0xf]
      %v276 = vld [vmem:[%s253 + $0x58] sm:$0xf]
      %v277 = vld [vmem:[%s253 + $0x5c] sm:$0xf]
      %v278 = vld [vmem:[%s253 + $0x60] sm:$0xf]
      %v279 = vld [vmem:[%s253 + $0x64] sm:$0xf]
      %v280 = vld [vmem:[%s253 + $0x68] sm:$0xf]
      %v281 = vld [vmem:[%s253 + $0x6c] sm:$0xf]
      %v282 = vld [vmem:[%s253 + $0x70] sm:$0xf]
      %v283 = vld [vmem:[%s253 + $0x74] sm:$0xf]
      %v284 = vld [vmem:[%s253 + $0x78] sm:$0xf]
      %v285 = vld [vmem:[%s253 + $0x7c] sm:$0xf]
      %s286 = scalar_lea.vmem %s4, %s229
      %v287 = vld [vmem:[%s286] sm:$0x1]
      %v288 = vld [vmem:[%s220] sm:$0xf]
      %v289 = vld [vmem:[%s220 + $0x4] sm:$0xf]
      %v290 = vld [vmem:[%s220 + $0x8] sm:$0xf]
      %v291 = vld [vmem:[%s220 + $0xc] sm:$0xf]
      %v292 = vld [vmem:[%s220 + $0x10] sm:$0xf]
      %v293 = vld [vmem:[%s220 + $0x14] sm:$0xf]
      %v294 = vld [vmem:[%s220 + $0x18] sm:$0xf]
      %v295 = vld [vmem:[%s220 + $0x1c] sm:$0xf]
      %v296 = vld [vmem:[%s220 + $0x20] sm:$0xf]
      %v297 = vld [vmem:[%s220 + $0x24] sm:$0xf]
      %v298 = vld [vmem:[%s220 + $0x28] sm:$0xf]
      %v299 = vld [vmem:[%s220 + $0x2c] sm:$0xf]
      %v300 = vld [vmem:[%s220 + $0x30] sm:$0xf]
      %v301 = vld [vmem:[%s220 + $0x34] sm:$0xf]
      %v302 = vld [vmem:[%s220 + $0x38] sm:$0xf]
      %v303 = vld [vmem:[%s220 + $0x3c] sm:$0xf]
      %v304 = vunpack.c.l.bf16 %v251
      %v306 = vperm.slane %v304, 0
      %v307 = vperm.slane %v304, 2
      %v310 = vperm.slane %v306, 0
      %v311 = vperm.slane %v307, 0
      %v328 = vunpack.c.l.b16 %v288
      %v329 = vunpack.c.l.b16 %v289
      %v330 = vunpack.c.l.b16 %v290
      %v331 = vunpack.c.l.b16 %v291
      %v332 = vunpack.c.l.b16 %v292
      %v333 = vunpack.c.l.b16 %v293
      %v334 = vunpack.c.l.b16 %v294
      %v335 = vunpack.c.l.b16 %v295
      %v336 = vunpack.c.l.b16 %v296
      %v337 = vunpack.c.l.b16 %v297
      %v338 = vunpack.c.l.b16 %v298
      %v339 = vunpack.c.l.b16 %v299
      %v340 = vunpack.c.l.b16 %v300
      %v341 = vunpack.c.l.b16 %v301
      %v342 = vunpack.c.l.b16 %v302
      %v343 = vunpack.c.l.b16 %v303
      %v344 = vpack.c.b16 %v329, %v328
      %v345 = vpack.c.b16 %v331, %v330
      %v346 = vpack.c.b16 %v333, %v332
      %v347 = vpack.c.b16 %v335, %v334
      %v348 = vpack.c.b16 %v337, %v336
      %v349 = vpack.c.b16 %v339, %v338
      %v350 = vpack.c.b16 %v341, %v340
      %v351 = vpack.c.b16 %v343, %v342
      %v376 = vunpack.c.l.b16 %v233
      %v377 = vunpack.c.h.b16 %v233
      %v378 = vunpack.c.l.b16 %v234
      %v379 = vunpack.c.h.b16 %v234
      %v380 = vunpack.c.l.b16 %v235
      %v381 = vunpack.c.h.b16 %v235
      %v382 = vunpack.c.l.b16 %v236
      %v383 = vunpack.c.h.b16 %v236
      %v384 = vunpack.c.l.b16 %v237
      %v385 = vunpack.c.h.b16 %v237
      %v386 = vunpack.c.l.b16 %v238
      %v387 = vunpack.c.h.b16 %v238
      %v388 = vunpack.c.l.b16 %v239
      %v389 = vunpack.c.h.b16 %v239
      %v390 = vunpack.c.l.b16 %v240
      %v391 = vunpack.c.h.b16 %v240
      %v392 = vunpack.c.l.b16 %v241
      %v393 = vunpack.c.h.b16 %v241
      %v394 = vunpack.c.l.b16 %v242
      %v395 = vunpack.c.h.b16 %v242
      %v396 = vunpack.c.l.b16 %v243
      %v397 = vunpack.c.h.b16 %v243
      %v398 = vunpack.c.l.b16 %v244
      %v399 = vunpack.c.h.b16 %v244
      %v400 = vunpack.c.l.b16 %v245
      %v401 = vunpack.c.h.b16 %v245
      %v402 = vunpack.c.l.b16 %v246
      %v403 = vunpack.c.h.b16 %v246
      %v404 = vunpack.c.l.b16 %v247
      %v405 = vunpack.c.h.b16 %v247
      %v406 = vunpack.c.l.b16 %v248
      %v407 = vunpack.c.h.b16 %v248
      %v408 = vpack.c.b16 %v378, %v376
      %v409 = vpack.c.b16 %v379, %v377
      %v410 = vpack.c.b16 %v382, %v380
      %v411 = vpack.c.b16 %v383, %v381
      %v412 = vpack.c.b16 %v386, %v384
      %v413 = vpack.c.b16 %v387, %v385
      %v414 = vpack.c.b16 %v390, %v388
      %v415 = vpack.c.b16 %v391, %v389
      %v416 = vpack.c.b16 %v394, %v392
      %v417 = vpack.c.b16 %v395, %v393
      %v418 = vpack.c.b16 %v398, %v396
      %v419 = vpack.c.b16 %v399, %v397
      %v420 = vpack.c.b16 %v402, %v400
      %v421 = vpack.c.b16 %v403, %v401
      %v422 = vpack.c.b16 %v406, %v404
      %v423 = vpack.c.b16 %v407, %v405
      %440 = vmatpush.bf16.msra.mxu0 %v422
      %441 = vmatpush.bf16.msra.mxu0 %v420
      %442 = vmatpush.bf16.msra.mxu0 %v418
      %443 = vmatpush.bf16.msra.mxu0 %v416
      %444 = vmatpush.bf16.msra.mxu0 %v414
      %445 = vmatpush.bf16.msra.mxu0 %v412
      %446 = vmatpush.bf16.msra.mxu0 %v410
      %447 = vmatpush.bf16.msra.mxu0 %v408
      %448 = vmatmul.bf16.gmra.mxu0 %v344
      %v449 = vpop.f32.mrf.mxu0
      %v450 = vadd.f32 %v310, %v449
      %v451 = vpop.f32.mrf.mxu0
      %v452 = vadd.f32 %v310, %v451
      %453 = vmatmul.bf16.gmra.mxu0 %v345
      %v454 = vpop.f32.mrf.mxu0
      %v455 = vadd.f32 %v310, %v454
      %v456 = vpop.f32.mrf.mxu0
      %v457 = vadd.f32 %v310, %v456
      %458 = vmatmul.bf16.gmra.mxu0 %v346
      %v459 = vpop.f32.mrf.mxu0
      %v460 = vadd.f32 %v310, %v459
      %v461 = vpop.f32.mrf.mxu0
      %v462 = vadd.f32 %v310, %v461
      %463 = vmatmul.bf16.gmra.mxu0 %v347
      %v464 = vpop.f32.mrf.mxu0
      %v465 = vadd.f32 %v310, %v464
      %v466 = vpop.f32.mrf.mxu0
      %v467 = vadd.f32 %v310, %v466
      %468 = vmatmul.bf16.gmra.mxu0 %v348
      %v469 = vpop.f32.mrf.mxu0
      %v470 = vadd.f32 %v310, %v469
      %v471 = vpop.f32.mrf.mxu0
      %v472 = vadd.f32 %v310, %v471
      %473 = vmatmul.bf16.gmra.mxu0 %v349
      %v474 = vpop.f32.mrf.mxu0
      %v475 = vadd.f32 %v310, %v474
      %v476 = vpop.f32.mrf.mxu0
      %v477 = vadd.f32 %v310, %v476
      %478 = vmatmul.bf16.gmra.mxu0 %v350
      %v479 = vpop.f32.mrf.mxu0
      %v480 = vadd.f32 %v310, %v479
      %v481 = vpop.f32.mrf.mxu0
      %v482 = vadd.f32 %v310, %v481
      %483 = vmatmul.bf16.gmra.mxu0 %v351
      %v484 = vpop.f32.mrf.mxu0
      %v485 = vadd.f32 %v310, %v484
      %v486 = vpop.f32.mrf.mxu0
      %v487 = vadd.f32 %v310, %v486
      %488 = vdwg.mxu0
      %489 = vmatpush.bf16.msra.mxu0 %v423
      %490 = vmatpush.bf16.msra.mxu0 %v421
      %491 = vmatpush.bf16.msra.mxu0 %v419
      %492 = vmatpush.bf16.msra.mxu0 %v417
      %493 = vmatpush.bf16.msra.mxu0 %v415
      %494 = vmatpush.bf16.msra.mxu0 %v413
      %495 = vmatpush.bf16.msra.mxu0 %v411
      %496 = vmatpush.bf16.msra.mxu0 %v409
      %497 = vmatmul.bf16.gmra.mxu0 %v344
      %v498 = vpop.f32.mrf.mxu0
      %v499 = vadd.f32 %v311, %v498
      %v500 = vpop.f32.mrf.mxu0
      %v501 = vadd.f32 %v311, %v500
      %502 = vmatmul.bf16.gmra.mxu0 %v345
      %v503 = vpop.f32.mrf.mxu0
      %v504 = vadd.f32 %v311, %v503
      %v505 = vpop.f32.mrf.mxu0
      %v506 = vadd.f32 %v311, %v505
      %507 = vmatmul.bf16.gmra.mxu0 %v346
      %v508 = vpop.f32.mrf.mxu0
      %v509 = vadd.f32 %v311, %v508
      %v510 = vpop.f32.mrf.mxu0
      %v511 = vadd.f32 %v311, %v510
      %512 = vmatmul.bf16.gmra.mxu0 %v347
      %v513 = vpop.f32.mrf.mxu0
      %v514 = vadd.f32 %v311, %v513
      %v515 = vpop.f32.mrf.mxu0
      %v516 = vadd.f32 %v311, %v515
      %517 = vmatmul.bf16.gmra.mxu0 %v348
      %v518 = vpop.f32.mrf.mxu0
      %v519 = vadd.f32 %v311, %v518
      %v520 = vpop.f32.mrf.mxu0
      %v521 = vadd.f32 %v311, %v520
      %522 = vmatmul.bf16.gmra.mxu0 %v349
      %v523 = vpop.f32.mrf.mxu0
      %v524 = vadd.f32 %v311, %v523
      %v525 = vpop.f32.mrf.mxu0
      %v526 = vadd.f32 %v311, %v525
      %527 = vmatmul.bf16.gmra.mxu0 %v350
      %v528 = vpop.f32.mrf.mxu0
      %v529 = vadd.f32 %v311, %v528
      %v530 = vpop.f32.mrf.mxu0
      %v531 = vadd.f32 %v311, %v530
      %532 = vmatmul.bf16.gmra.mxu0 %v351
      %v533 = vpop.f32.mrf.mxu0
      %v534 = vadd.f32 %v311, %v533
      %v535 = vpop.f32.mrf.mxu0
      %v536 = vadd.f32 %v311, %v535
      %537 = vdwg.mxu0
      %v538 = vmax.f32 %v450, 0.0
      %v539 = vmax.f32 %v499, 0.0
      %v540 = vmax.f32 %v452, 0.0
      %v541 = vmax.f32 %v501, 0.0
      %v542 = vmax.f32 %v455, 0.0
      %v543 = vmax.f32 %v504, 0.0
      %v544 = vmax.f32 %v457, 0.0
      %v545 = vmax.f32 %v506, 0.0
      %v546 = vmax.f32 %v460, 0.0
      %v547 = vmax.f32 %v509, 0.0
      %v548 = vmax.f32 %v462, 0.0
      %v549 = vmax.f32 %v511, 0.0
      %v550 = vmax.f32 %v465, 0.0
      %v551 = vmax.f32 %v514, 0.0
      %v552 = vmax.f32 %v467, 0.0
      %v553 = vmax.f32 %v516, 0.0
      %v554 = vmax.f32 %v470, 0.0
      %v555 = vmax.f32 %v519, 0.0
      %v556 = vmax.f32 %v472, 0.0
      %v557 = vmax.f32 %v521, 0.0
      %v558 = vmax.f32 %v475, 0.0
      %v559 = vmax.f32 %v524, 0.0
      %v560 = vmax.f32 %v477, 0.0
      %v561 = vmax.f32 %v526, 0.0
      %v562 = vmax.f32 %v480, 0.0
      %v563 = vmax.f32 %v529, 0.0
      %v564 = vmax.f32 %v482, 0.0
      %v565 = vmax.f32 %v531, 0.0
      %v566 = vmax.f32 %v485, 0.0
      %v567 = vmax.f32 %v534, 0.0
      %v568 = vmax.f32 %v487, 0.0
      %v569 = vmax.f32 %v536, 0.0
      %v570 = vpack.c.bf16 %v540, %v538
      %v571 = vpack.c.bf16 %v541, %v539
      %v572 = vpack.c.bf16 %v544, %v542
      %v573 = vpack.c.bf16 %v545, %v543
      %v574 = vpack.c.bf16 %v548, %v546
      %v575 = vpack.c.bf16 %v549, %v547
      %v576 = vpack.c.bf16 %v552, %v550
      %v577 = vpack.c.bf16 %v553, %v551
      %v578 = vpack.c.bf16 %v556, %v554
      %v579 = vpack.c.bf16 %v557, %v555
      %v580 = vpack.c.bf16 %v560, %v558
      %v581 = vpack.c.bf16 %v561, %v559
      %v582 = vpack.c.bf16 %v564, %v562
      %v583 = vpack.c.bf16 %v565, %v563
      %v584 = vpack.c.bf16 %v568, %v566
      %v585 = vpack.c.bf16 %v569, %v567
      %v586 = vunpack.c.l.bf16 %v287
      %v587 = vperm.slane %v586, 0
      %v620 = vunpack.c.l.b16 %v254
      %v621 = vunpack.c.l.b16 %v255
      %v622 = vunpack.c.l.b16 %v256
      %v623 = vunpack.c.l.b16 %v257
      %v624 = vunpack.c.l.b16 %v258
      %v625 = vunpack.c.l.b16 %v259
      %v626 = vunpack.c.l.b16 %v260
      %v627 = vunpack.c.l.b16 %v261
      %v628 = vunpack.c.l.b16 %v262
      %v629 = vunpack.c.l.b16 %v263
      %v630 = vunpack.c.l.b16 %v264
      %v631 = vunpack.c.l.b16 %v265
      %v632 = vunpack.c.l.b16 %v266
      %v633 = vunpack.c.l.b16 %v267
      %v634 = vunpack.c.l.b16 %v268
      %v635 = vunpack.c.l.b16 %v269
      %v636 = vunpack.c.l.b16 %v270
      %v637 = vunpack.c.l.b16 %v271
      %v638 = vunpack.c.l.b16 %v272
      %v639 = vunpack.c.l.b16 %v273
      %v640 = vunpack.c.l.b16 %v274
      %v641 = vunpack.c.l.b16 %v275
      %v642 = vunpack.c.l.b16 %v276
      %v643 = vunpack.c.l.b16 %v277
      %v644 = vunpack.c.l.b16 %v278
      %v645 = vunpack.c.l.b16 %v279
      %v646 = vunpack.c.l.b16 %v280
      %v647 = vunpack.c.l.b16 %v281
      %v648 = vunpack.c.l.b16 %v282
      %v649 = vunpack.c.l.b16 %v283
      %v650 = vunpack.c.l.b16 %v284
      %v651 = vunpack.c.l.b16 %v285
      %v652 = vpack.c.b16 %v621, %v620
      %v653 = vpack.c.b16 %v623, %v622
      %v654 = vpack.c.b16 %v625, %v624
      %v655 = vpack.c.b16 %v627, %v626
      %v656 = vpack.c.b16 %v629, %v628
      %v657 = vpack.c.b16 %v631, %v630
      %v658 = vpack.c.b16 %v633, %v632
      %v659 = vpack.c.b16 %v635, %v634
      %v660 = vpack.c.b16 %v637, %v636
      %v661 = vpack.c.b16 %v639, %v638
      %v662 = vpack.c.b16 %v641, %v640
      %v663 = vpack.c.b16 %v643, %v642
      %v664 = vpack.c.b16 %v645, %v644
      %v665 = vpack.c.b16 %v647, %v646
      %v666 = vpack.c.b16 %v649, %v648
      %v667 = vpack.c.b16 %v651, %v650
      %684 = vmatpush.bf16.msra.mxu0 %v659
      %685 = vmatpush.bf16.msra.mxu0 %v658
      %686 = vmatpush.bf16.msra.mxu0 %v657
      %687 = vmatpush.bf16.msra.mxu0 %v656
      %688 = vmatpush.bf16.msra.mxu0 %v655
      %689 = vmatpush.bf16.msra.mxu0 %v654
      %690 = vmatpush.bf16.msra.mxu0 %v653
      %691 = vmatpush.bf16.msra.mxu0 %v652
      %692 = vmatmul.bf16.gmra.mxu0 %v570
      %v693 = vpop.f32.mrf.mxu0
      %v694 = vadd.f32 %v587, %v693
      %v695 = vpop.f32.mrf.mxu0
      %v696 = vadd.f32 %v587, %v695
      %697 = vmatmul.bf16.gmra.mxu0 %v572
      %v698 = vpop.f32.mrf.mxu0
      %v699 = vadd.f32 %v587, %v698
      %v700 = vpop.f32.mrf.mxu0
      %v701 = vadd.f32 %v587, %v700
      %702 = vmatmul.bf16.gmra.mxu0 %v574
      %v703 = vpop.f32.mrf.mxu0
      %v704 = vadd.f32 %v587, %v703
      %v705 = vpop.f32.mrf.mxu0
      %v706 = vadd.f32 %v587, %v705
      %707 = vmatmul.bf16.gmra.mxu0 %v576
      %v708 = vpop.f32.mrf.mxu0
      %v709 = vadd.f32 %v587, %v708
      %v710 = vpop.f32.mrf.mxu0
      %v711 = vadd.f32 %v587, %v710
      %712 = vmatmul.bf16.gmra.mxu0 %v578
      %v713 = vpop.f32.mrf.mxu0
      %v714 = vadd.f32 %v587, %v713
      %v715 = vpop.f32.mrf.mxu0
      %v716 = vadd.f32 %v587, %v715
      %717 = vmatmul.bf16.gmra.mxu0 %v580
      %v718 = vpop.f32.mrf.mxu0
      %v719 = vadd.f32 %v587, %v718
      %v720 = vpop.f32.mrf.mxu0
      %v721 = vadd.f32 %v587, %v720
      %722 = vmatmul.bf16.gmra.mxu0 %v582
      %v723 = vpop.f32.mrf.mxu0
      %v724 = vadd.f32 %v587, %v723
      %v725 = vpop.f32.mrf.mxu0
      %v726 = vadd.f32 %v587, %v725
      %727 = vmatmul.bf16.gmra.mxu0 %v584
      %v728 = vpop.f32.mrf.mxu0
      %v729 = vadd.f32 %v587, %v728
      %v730 = vpop.f32.mrf.mxu0
      %v731 = vadd.f32 %v587, %v730
      %732 = vdwg.mxu0
      %733 = vmatpush.bf16.msra.mxu0 %v667
      %734 = vmatpush.bf16.msra.mxu0 %v666
      %735 = vmatpush.bf16.msra.mxu0 %v665
      %736 = vmatpush.bf16.msra.mxu0 %v664
      %737 = vmatpush.bf16.msra.mxu0 %v663
      %738 = vmatpush.bf16.msra.mxu0 %v662
      %739 = vmatpush.bf16.msra.mxu0 %v661
      %740 = vmatpush.bf16.msra.mxu0 %v660
      %741 = vmatmul.bf16.gmra.mxu0 %v571
      %v742 = vpop.f32.mrf.mxu0
      %v743 = vadd.f32 %v694, %v742
      %v744 = vpop.f32.mrf.mxu0
      %v745 = vadd.f32 %v696, %v744
      %746 = vmatmul.bf16.gmra.mxu0 %v573
      %v747 = vpop.f32.mrf.mxu0
      %v748 = vadd.f32 %v699, %v747
      %v749 = vpop.f32.mrf.mxu0
      %v750 = vadd.f32 %v701, %v749
      %751 = vmatmul.bf16.gmra.mxu0 %v575
      %v752 = vpop.f32.mrf.mxu0
      %v753 = vadd.f32 %v704, %v752
      %v754 = vpop.f32.mrf.mxu0
      %v755 = vadd.f32 %v706, %v754
      %756 = vmatmul.bf16.gmra.mxu0 %v577
      %v757 = vpop.f32.mrf.mxu0
      %v758 = vadd.f32 %v709, %v757
      %v759 = vpop.f32.mrf.mxu0
      %v760 = vadd.f32 %v711, %v759
      %761 = vmatmul.bf16.gmra.mxu0 %v579
      %v762 = vpop.f32.mrf.mxu0
      %v763 = vadd.f32 %v714, %v762
      %v764 = vpop.f32.mrf.mxu0
      %v765 = vadd.f32 %v716, %v764
      %766 = vmatmul.bf16.gmra.mxu0 %v581
      %v767 = vpop.f32.mrf.mxu0
      %v768 = vadd.f32 %v719, %v767
      %v769 = vpop.f32.mrf.mxu0
      %v770 = vadd.f32 %v721, %v769
      %771 = vmatmul.bf16.gmra.mxu0 %v583
      %v772 = vpop.f32.mrf.mxu0
      %v773 = vadd.f32 %v724, %v772
      %v774 = vpop.f32.mrf.mxu0
      %v775 = vadd.f32 %v726, %v774
      %776 = vmatmul.bf16.gmra.mxu0 %v585
      %v777 = vpop.f32.mrf.mxu0
      %v778 = vadd.f32 %v729, %v777
      %v779 = vpop.f32.mrf.mxu0
      %v780 = vadd.f32 %v731, %v779
      %781 = vdwg.mxu0
      %v782 = vpack.c.bf16 %v743, %v743
      %v783 = vpack.c.bf16 %v745, %v745
      %v784 = vpack.c.bf16 %v748, %v748
      %v785 = vpack.c.bf16 %v750, %v750
      %v786 = vpack.c.bf16 %v753, %v753
      %v787 = vpack.c.bf16 %v755, %v755
      %v788 = vpack.c.bf16 %v758, %v758
      %v789 = vpack.c.bf16 %v760, %v760
      %v790 = vpack.c.bf16 %v763, %v763
      %v791 = vpack.c.bf16 %v765, %v765
      %v792 = vpack.c.bf16 %v768, %v768
      %v793 = vpack.c.bf16 %v770, %v770
      %v794 = vpack.c.bf16 %v773, %v773
      %v795 = vpack.c.bf16 %v775, %v775
      %v796 = vpack.c.bf16 %v778, %v778
      %v797 = vpack.c.bf16 %v780, %v780
      %798 = vst [vmem:[%s226] sm:$0xf] %v782
      %799 = vst [vmem:[%s226 + $0x4] sm:$0xf] %v783
      %800 = vst [vmem:[%s226 + $0x8] sm:$0xf] %v784
      %801 = vst [vmem:[%s226 + $0xc] sm:$0xf] %v785
      %802 = vst [vmem:[%s226 + $0x10] sm:$0xf] %v786
      %803 = vst [vmem:[%s226 + $0x14] sm:$0xf] %v787
      %804 = vst [vmem:[%s226 + $0x18] sm:$0xf] %v788
      %805 = vst [vmem:[%s226 + $0x1c] sm:$0xf] %v789
      %806 = vst [vmem:[%s226 + $0x20] sm:$0xf] %v790
      %807 = vst [vmem:[%s226 + $0x24] sm:$0xf] %v791
      %808 = vst [vmem:[%s226 + $0x28] sm:$0xf] %v792
      %809 = vst [vmem:[%s226 + $0x2c] sm:$0xf] %v793
      %810 = vst [vmem:[%s226 + $0x30] sm:$0xf] %v794
      %811 = vst [vmem:[%s226 + $0x34] sm:$0xf] %v795
      %812 = vst [vmem:[%s226 + $0x38] sm:$0xf] %v796
      %813 = vst [vmem:[%s226 + $0x3c] sm:$0xf] %v797
      %s814 = smul.u32 16, %s16
      %p815 = scmp.lt.s32.totalorder %s814, 31
      %s816 = scalar_select %p815, %s814, 31
      %s817 = smul.addr %s816, 4
      %s818 = scalar_lea.vmem %s5, %s817
      // Predicated region
      $region41: #{_lambda_.1} parent=39 // pred_check
        %p819 = pneg %p144
      $region42: #{_lambda_.1} parent=39 // pred_check_branch
        %821 = sbr.rel (%p819) target = $region44
      $region43: #{_lambda_.1} parent=39 // pred_region
        %s822 = smul.u32 16, %s16
      $region44: #{_lambda_.1} parent=39 // pred_fallthru
        _
    $region40: #{_lambda_.1} parent=5 // pred_fallthru
      _
    %p823 = scmp.le.s32.totalorder 2, %s11
    // Predicated region
    $region45: #{_lambda_.1} parent=5 // pred_check
      %p824 = pneg %p823
    $region46: #{_lambda_.1} parent=5 // pred_check_branch
      %826 = sbr.rel (%p824) target = $region48
    $region47: #{_lambda_.1} parent=5 // pred_region
      %s827 = ssub.s32 %s11, 2
      // Predicated region
      $region49: #{_lambda_.1} parent=47 // pred_check
        %p828 = pneg %p150
      $region50: #{_lambda_.1} parent=47 // pred_check_branch
        %830 = sbr.rel (%p828) target = $region52
      $region51: #{_lambda_.1} parent=47 // pred_region
        %s831 = smul.u32 16, %s17
        %p832 = scmp.lt.s32.totalorder %s831, 31
        %s833 = scalar_select %p832, %s831, 31
        %s834 = smul.addr %s833, 4
        %s835 = scalar_lea.vmem %s5, %s834
      $region52: #{_lambda_.1} parent=47 // pred_fallthru
        _
    $region48: #{_lambda_.1} parent=5 // pred_fallthru
      _
  $region6: #{_lambda_.1} parent=0 // loop_footer
    %s15 = sadd.s32 1, %s11
  $region7: #{_lambda_.1} parent=0 // loop_footer_branch
    %10 = sbr.rel target = $region3
  $region8: #{_lambda_.1} parent=0 // loop_exit
    _

</llo_original>
